<compile_context>
chip_gen: v5e
topology: v5e:2x2
jax: 0.10.0
libtpu: 0.0.40
codegen_flags: <defaults>
</compile_context>

<pallas_src>
import jax
import jax.numpy as jnp
from jax.experimental import pallas as pl
from jax.experimental.pallas import tpu as pltpu

H1, H2, H3 = 256, 512, 256
OUT_LANES = 128  # lane-dense output slab; real value lives in column 0


def critic_kernel(x_ref, w1_ref, b1_ref, w2_ref, b2_ref,
                  w3_ref, b3_ref, w4_ref, b4_ref, out_ref):
    # Layer 1: [TB, D] @ [D, 256] + [1, 256] -> relu   (f32 accumulation)
    h = jnp.dot(x_ref[...].astype(w1_ref.dtype), w1_ref[...],
                preferred_element_type=jnp.float32)
    h = jnp.maximum(h + b1_ref[...], 0.0)
    # Layer 2: [TB, 256] @ [256, 512] + [1, 512] -> relu
    h = jnp.dot(h.astype(w2_ref.dtype), w2_ref[...],
                preferred_element_type=jnp.float32)
    h = jnp.maximum(h + b2_ref[...], 0.0)
    # Layer 3: [TB, 512] @ [512, 256] + [1, 256] -> relu
    h = jnp.dot(h.astype(w3_ref.dtype), w3_ref[...],
                preferred_element_type=jnp.float32)
    h = jnp.maximum(h + b3_ref[...], 0.0)
    # Layer 4 (N=1, no activation): VPU multiply + XLU row-sum instead of an
    # MXU matmul with 255/256 idle columns. w4 is stored as [1, 256].
    v = jnp.sum(h * w4_ref[...].astype(jnp.float32), axis=-1, keepdims=True)
    v = v + b4_ref[...]                                   # [TB, 1]
    # Lane-dense writeback: broadcast across 128 lanes (no masked stores).
    out_ref[...] = jnp.broadcast_to(v, out_ref.shape).astype(out_ref.dtype)


def _round_up(n, m):
    return ((n + m - 1) // m) * m


def critic_forward(x, params, *, batch_tile=256):
    """x: [B, input_dims] float32. Returns value: [B, 1] float32."""
    (w1, b1), (w2, b2), (w3, b3), (w4, b4) = params
    B, D = x.shape

    # Adaptive tile: don't pad a tiny batch up to `batch_tile` rows of
    # wasted MXU work; 8 = sublane granularity.
    TB = min(batch_tile, _round_up(B, 8))
    n_tiles = pl.cdiv(B, TB)
    B_pad = n_tiles * TB
    if B_pad != B:
        # Pad batch to a whole number of tiles; padded rows are discarded below.
        x = jnp.pad(x, ((0, B_pad - B), (0, 0)))

    # x / out move with the batch tile; weights & biases stay resident.
    tiled = lambda shape: pl.BlockSpec(shape, lambda i: (i, 0))
    resident = lambda shape: pl.BlockSpec(shape, lambda i: (0, 0))

    in_specs = [
        tiled((TB, D)),
        resident(w1.shape), resident(b1.shape),
        resident(w2.shape), resident(b2.shape),
        resident(w3.shape), resident(b3.shape),
        resident(w4.shape), resident(b4.shape),
    ]

    flops = 2 * B_pad * (D * H1 + H1 * H2 + H2 * H3 + H3)
    bytes_accessed = (
        sum(int(a.size) * a.dtype.itemsize for p in params for a in p)
        + int(x.size) * x.dtype.itemsize
        + B_pad * OUT_LANES * 4
    )

    out = pl.pallas_call(
        critic_kernel,
        out_shape=jax.ShapeDtypeStruct((B_pad, OUT_LANES), jnp.float32),
        grid=(n_tiles,),
        in_specs=in_specs,
        out_specs=tiled((TB, OUT_LANES)),
        compiler_params=pltpu.CompilerParams(
            dimension_semantics=("parallel",),
        ),
        cost_estimate=pl.CostEstimate(
            flops=flops, transcendentals=0, bytes_accessed=bytes_accessed),
    )(x, w1, b1, w2, b2, w3, b3, w4, b4)

    return out[:B, :1]


def init_params(key, input_dims, weight_dtype=jnp.float32):
    """PyTorch-style uniform(-1/sqrt(fan_in), 1/sqrt(fan_in)) init.

    Weights are stored [in_dim, out_dim] (transposed vs nn.Linear) so the
    kernel computes x @ W; the final layer's weight is stored as a [1, 256]
    row for the VPU/XLU reduction. Biases are [1, out_dim] rows (f32).
    """
    dims = [(input_dims, H1), (H1, H2), (H2, H3), (H3, 1)]
    params = []
    for li, (fan_in, fan_out) in enumerate(dims):
        key, kw, kb = jax.random.split(key, 3)
        bound = 1.0 / jnp.sqrt(jnp.float32(fan_in))
        if li == 3:
            w = jax.random.uniform(kw, (1, fan_in), jnp.float32, -bound, bound)
        else:
            w = jax.random.uniform(kw, (fan_in, fan_out), jnp.float32,
                                   -bound, bound)
        b = jax.random.uniform(kb, (1, fan_out), jnp.float32, -bound, bound)
        params.append((w.astype(weight_dtype), b))
    return params


def reference_forward(x, params):
    (w1, b1), (w2, b2), (w3, b3), (w4, b4) = params
    h = jnp.maximum(x @ w1.astype(jnp.float32) + b1, 0.0)
    h = jnp.maximum(h @ w2.astype(jnp.float32) + b2, 0.0)
    h = jnp.maximum(h @ w3.astype(jnp.float32) + b3, 0.0)
    return jnp.sum(h * w4.astype(jnp.float32), axis=-1, keepdims=True) + b4


if __name__ == "__main__":
    INPUT_DIMS = 32
    BATCH = 8

    key = jax.random.PRNGKey(0)
    key, kx = jax.random.split(key)
    x = jax.random.normal(kx, (BATCH, INPUT_DIMS), jnp.float32)
    params = init_params(key, INPUT_DIMS)  # weight_dtype=jnp.bfloat16 for perf

    out = critic_forward(x, params)
    out = jax.block_until_ready(out)

    ref = reference_forward(x, params)
    assert out.shape == (BATCH, 1), out.shape
    assert jnp.allclose(out, ref, atol=1e-4, rtol=1e-4), (out, ref)

    print("KERNEL_OK")
</pallas_src>

<mosaic_0001>
module attributes {stable_mosaic.version = 11 : i64} {
  func.func @critic_kernel(%arg0: i32, %arg1: memref<8x32xf32, #tpu.memory_space<vmem>>, %arg2: memref<32x256xf32, #tpu.memory_space<vmem>>, %arg3: memref<1x256xf32, #tpu.memory_space<vmem>>, %arg4: memref<256x512xf32, #tpu.memory_space<vmem>>, %arg5: memref<1x512xf32, #tpu.memory_space<vmem>>, %arg6: memref<512x256xf32, #tpu.memory_space<vmem>>, %arg7: memref<1x256xf32, #tpu.memory_space<vmem>>, %arg8: memref<1x256xf32, #tpu.memory_space<vmem>>, %arg9: memref<1x1xf32, #tpu.memory_space<vmem>>, %arg10: memref<8x128xf32, #tpu.memory_space<vmem>>) attributes {dimension_semantics = [#tpu.dimension_semantics<parallel>], iteration_bounds = array<i64: 1>, scalar_prefetch = 0 : i64, scratch_operands = 0 : i64, tpu.core_type = #tpu.core_type<tc>, window_params = [{transform_indices = @transform_0, window_bounds = array<i64: 8, 32>}, {pipeline_mode = #tpu.pipeline_mode<synchronous>, transform_indices = @transform_1, window_bounds = array<i64: 32, 256>}, {pipeline_mode = #tpu.pipeline_mode<synchronous>, transform_indices = @transform_2, window_bounds = array<i64: 1, 256>}, {pipeline_mode = #tpu.pipeline_mode<synchronous>, transform_indices = @transform_3, window_bounds = array<i64: 256, 512>}, {pipeline_mode = #tpu.pipeline_mode<synchronous>, transform_indices = @transform_4, window_bounds = array<i64: 1, 512>}, {pipeline_mode = #tpu.pipeline_mode<synchronous>, transform_indices = @transform_5, window_bounds = array<i64: 512, 256>}, {pipeline_mode = #tpu.pipeline_mode<synchronous>, transform_indices = @transform_6, window_bounds = array<i64: 1, 256>}, {pipeline_mode = #tpu.pipeline_mode<synchronous>, transform_indices = @transform_7, window_bounds = array<i64: 1, 256>}, {pipeline_mode = #tpu.pipeline_mode<synchronous>, transform_indices = @transform_8, window_bounds = array<i64: 1, 1>}, {transform_indices = @transform_9, window_bounds = array<i64: 8, 128>}]} {
    %c0 = arith.constant 0 : index
    %c0_0 = arith.constant 0 : index
    %0 = vector.load %arg1[%c0, %c0_0] : memref<8x32xf32, #tpu.memory_space<vmem>>, vector<8x32xf32>
    %c0_1 = arith.constant 0 : index
    %c0_2 = arith.constant 0 : index
    %1 = vector.load %arg2[%c0_1, %c0_2] : memref<32x256xf32, #tpu.memory_space<vmem>>, vector<32x256xf32>
    %cst = arith.constant dense<0.000000e+00> : vector<8x256xf32>
    %2 = tpu.matmul %0, %1, %cst {dimension_numbers = #tpu.dot_dimension_numbers<[1], [0], [0], [1], [0, 0, 1, 1], [], []>} : vector<8x32xf32>, vector<32x256xf32>, vector<8x256xf32> -> vector<8x256xf32>
    %c0_3 = arith.constant 0 : index
    %c0_4 = arith.constant 0 : index
    %3 = vector.load %arg3[%c0_3, %c0_4] : memref<1x256xf32, #tpu.memory_space<vmem>>, vector<1x256xf32>
    %4 = vector.broadcast %3 : vector<1x256xf32> to vector<8x256xf32>
    %5 = arith.addf %2, %4 : vector<8x256xf32>
    %cst_5 = arith.constant 0.000000e+00 : f32
    %6 = vector.broadcast %cst_5 : f32 to vector<8x256xf32>
    %7 = arith.maximumf %5, %6 : vector<8x256xf32>
    %c0_6 = arith.constant 0 : index
    %c0_7 = arith.constant 0 : index
    %8 = vector.load %arg4[%c0_6, %c0_7] : memref<256x512xf32, #tpu.memory_space<vmem>>, vector<256x512xf32>
    %cst_8 = arith.constant dense<0.000000e+00> : vector<8x512xf32>
    %9 = tpu.matmul %7, %8, %cst_8 {dimension_numbers = #tpu.dot_dimension_numbers<[1], [0], [0], [1], [0, 0, 1, 1], [], []>} : vector<8x256xf32>, vector<256x512xf32>, vector<8x512xf32> -> vector<8x512xf32>
    %c0_9 = arith.constant 0 : index
    %c0_10 = arith.constant 0 : index
    %10 = vector.load %arg5[%c0_9, %c0_10] : memref<1x512xf32, #tpu.memory_space<vmem>>, vector<1x512xf32>
    %11 = vector.broadcast %10 : vector<1x512xf32> to vector<8x512xf32>
    %12 = arith.addf %9, %11 : vector<8x512xf32>
    %cst_11 = arith.constant 0.000000e+00 : f32
    %13 = vector.broadcast %cst_11 : f32 to vector<8x512xf32>
    %14 = arith.maximumf %12, %13 : vector<8x512xf32>
    %c0_12 = arith.constant 0 : index
    %c0_13 = arith.constant 0 : index
    %15 = vector.load %arg6[%c0_12, %c0_13] : memref<512x256xf32, #tpu.memory_space<vmem>>, vector<512x256xf32>
    %cst_14 = arith.constant dense<0.000000e+00> : vector<8x256xf32>
    %16 = tpu.matmul %14, %15, %cst_14 {dimension_numbers = #tpu.dot_dimension_numbers<[1], [0], [0], [1], [0, 0, 1, 1], [], []>} : vector<8x512xf32>, vector<512x256xf32>, vector<8x256xf32> -> vector<8x256xf32>
    %c0_15 = arith.constant 0 : index
    %c0_16 = arith.constant 0 : index
    %17 = vector.load %arg7[%c0_15, %c0_16] : memref<1x256xf32, #tpu.memory_space<vmem>>, vector<1x256xf32>
    %18 = vector.broadcast %17 : vector<1x256xf32> to vector<8x256xf32>
    %19 = arith.addf %16, %18 : vector<8x256xf32>
    %cst_17 = arith.constant 0.000000e+00 : f32
    %20 = vector.broadcast %cst_17 : f32 to vector<8x256xf32>
    %21 = arith.maximumf %19, %20 : vector<8x256xf32>
    %c0_18 = arith.constant 0 : index
    %c0_19 = arith.constant 0 : index
    %22 = vector.load %arg8[%c0_18, %c0_19] : memref<1x256xf32, #tpu.memory_space<vmem>>, vector<1x256xf32>
    %23 = vector.broadcast %22 : vector<1x256xf32> to vector<8x256xf32>
    %24 = arith.mulf %21, %23 : vector<8x256xf32>
    %cst_20 = arith.constant dense<0.000000e+00> : vector<8xf32>
    %25 = vector.multi_reduction <add>, %24, %cst_20 [1] : vector<8x256xf32> to vector<8xf32>
    %26 = vector.shape_cast %25 : vector<8xf32> to vector<8x1xf32>
    %c0_21 = arith.constant 0 : index
    %c0_22 = arith.constant 0 : index
    %27 = vector.load %arg9[%c0_21, %c0_22] : memref<1x1xf32, #tpu.memory_space<vmem>>, vector<1x1xf32>
    %28 = vector.broadcast %27 : vector<1x1xf32> to vector<8x1xf32>
    %29 = arith.addf %26, %28 : vector<8x1xf32>
    %30 = vector.shape_cast %29 : vector<8x1xf32> to vector<8x1xf32>
    %31 = vector.broadcast %30 : vector<8x1xf32> to vector<8x128xf32>
    %c0_23 = arith.constant 0 : index
    %c0_24 = arith.constant 0 : index
    %32 = vector.load %arg10[%c0_23, %c0_24] : memref<8x128xf32, #tpu.memory_space<vmem>>, vector<8x128xf32>
    tpu.vector_store %arg10[%c0_23, %c0_24], %31 {strides = array<i32>} : memref<8x128xf32, #tpu.memory_space<vmem>>, vector<8x128xf32>,
    return
  }
  func.func @transform_0(%arg0: i32) -> (i32, i32) {
    %c0_i32 = arith.constant 0 : i32
    %c0_i32_0 = arith.constant 0 : i32
    return %arg0, %c0_i32 : i32, i32
  }
  func.func @transform_1(%arg0: i32) -> (i32, i32) {
    %c0_i32 = arith.constant 0 : i32
    %c0_i32_0 = arith.constant 0 : i32
    %c0_i32_1 = arith.constant 0 : i32
    return %c0_i32, %c0_i32_0 : i32, i32
  }
  func.func @transform_2(%arg0: i32) -> (i32, i32) {
    %c0_i32 = arith.constant 0 : i32
    %c0_i32_0 = arith.constant 0 : i32
    %c0_i32_1 = arith.constant 0 : i32
    return %c0_i32, %c0_i32_0 : i32, i32
  }
  func.func @transform_3(%arg0: i32) -> (i32, i32) {
    %c0_i32 = arith.constant 0 : i32
    %c0_i32_0 = arith.constant 0 : i32
    %c0_i32_1 = arith.constant 0 : i32
    return %c0_i32, %c0_i32_0 : i32, i32
  }
  func.func @transform_4(%arg0: i32) -> (i32, i32) {
    %c0_i32 = arith.constant 0 : i32
    %c0_i32_0 = arith.constant 0 : i32
    %c0_i32_1 = arith.constant 0 : i32
    return %c0_i32, %c0_i32_0 : i32, i32
  }
  func.func @transform_5(%arg0: i32) -> (i32, i32) {
    %c0_i32 = arith.constant 0 : i32
    %c0_i32_0 = arith.constant 0 : i32
    %c0_i32_1 = arith.constant 0 : i32
    return %c0_i32, %c0_i32_0 : i32, i32
  }
  func.func @transform_6(%arg0: i32) -> (i32, i32) {
    %c0_i32 = arith.constant 0 : i32
    %c0_i32_0 = arith.constant 0 : i32
    %c0_i32_1 = arith.constant 0 : i32
    return %c0_i32, %c0_i32_0 : i32, i32
  }
  func.func @transform_7(%arg0: i32) -> (i32, i32) {
    %c0_i32 = arith.constant 0 : i32
    %c0_i32_0 = arith.constant 0 : i32
    %c0_i32_1 = arith.constant 0 : i32
    return %c0_i32, %c0_i32_0 : i32, i32
  }
  func.func @transform_8(%arg0: i32) -> (i32, i32) {
    %c0_i32 = arith.constant 0 : i32
    %c0_i32_0 = arith.constant 0 : i32
    %c0_i32_1 = arith.constant 0 : i32
    return %c0_i32, %c0_i32_0 : i32, i32
  }
  func.func @transform_9(%arg0: i32) -> (i32, i32) {
    %c0_i32 = arith.constant 0 : i32
    %c0_i32_0 = arith.constant 0 : i32
    return %arg0, %c0_i32 : i32, i32
  }
}

</mosaic_0001>

<llo_original>
// kernel: tpu_custom_call.1
$region0: #{tpu_custom_call.1}
  #allocation0 [shape = 'u32[]', space=smem, size = 0x4, offset = 0x4, fixed_abs, tag = 'smem constant byte address 0x4 - core index']
  #allocation1 [shape = 'u32[72,128]{1,0:T(1,128)}', space=vmem, size = 0x9000, scoped, tag = 'internal scratch']
  #allocation2 [shape = 'f32[1,1]{1,0:T(1,128)S(1)}', space=vmem, size = 0x200, scoped, tag = 'scoped memory for tpu_custom_call.1']
  %s0 = inlined_call_operand.hbm [shape: f32[8,32], index: 0, kind: input, shape index: {}]
  %s1 = inlined_call_operand.hbm [shape: f32[32,256], index: 1, kind: input, shape index: {}]
  %s2 = inlined_call_operand.hbm [shape: f32[1,256], index: 2, kind: input, shape index: {}]
  %s3 = inlined_call_operand.hbm [shape: f32[256,512], index: 3, kind: input, shape index: {}]
  %s4 = inlined_call_operand.vmem [shape: f32[1,512], index: 4, kind: input, shape index: {}]
  %s5 = inlined_call_operand.hbm [shape: f32[512,256], index: 5, kind: input, shape index: {}]
  %s6 = inlined_call_operand.vmem [shape: f32[1,256], index: 6, kind: input, shape index: {}]
  %s7 = inlined_call_operand.vmem [shape: f32[1,256], index: 7, kind: input, shape index: {}]
  %s8 = inlined_call_operand.<no memory space> [shape: f32[1,1], index: 8, kind: input, shape index: {}]
  %s9 = inlined_call_operand.hbm [shape: f32[8,128], index: 9, kind: output, shape index: {}]
  %s10 = sld [smem:[#allocation0]]
  $region66: #{tpu_custom_call.1} parent=0
    _
  %s12 = ssub.s32 1, %s10
  %s13 = scalar_select 0, %s12, %s10
  %v14 = vstv %s8
  %15 = vst [vmem:[#allocation2] sm:$0x1] %v14
  $region1: #{tpu_custom_call.1} parent=0
    #allocation3 [shape = 'u8[4096]{0}', space=vmem, size = 0x1000, scoped, tag = 'input window, operand 0, single buffered']
    #allocation4 [shape = 's32[1]{0}', space=sflag, size = 0x4, scoped, tag = 'scoped memory for tpu_custom_call.1']
    #allocation5 [shape = 's32[1]{0}', space=sflag, size = 0x4, scoped, tag = 'scoped memory for tpu_custom_call.1']
    #allocation6 [shape = 'u8[32768]{0}', space=vmem, size = 0x8000, scoped, tag = 'input window, operand 1, single buffered']
    #allocation7 [shape = 's32[1]{0}', space=sflag, size = 0x4, scoped, tag = 'scoped memory for tpu_custom_call.1']
    #allocation8 [shape = 'u8[1024]{0}', space=vmem, size = 0x400, scoped, tag = 'input window, operand 2, single buffered']
    #allocation9 [shape = 'u8[524288]{0}', space=vmem, size = 0x80000, scoped, tag = 'input window, operand 3, single buffered']
    #allocation10 [shape = 's32[1]{0}', space=sflag, size = 0x4, scoped, tag = 'scoped memory for tpu_custom_call.1']
    #allocation11 [shape = 'u8[524288]{0}', space=vmem, size = 0x80000, scoped, tag = 'input window, operand 5, single buffered']
    #allocation12 [shape = 'u8[4096]{0}', space=vmem, size = 0x1000, scoped, tag = 'output window, operand 0, single buffered']
    %16 = vsyncpa [#allocation4], 0
    %17 = vsyncpa [#allocation7], 0
    %18 = vsyncpa [#allocation10], 0
    %19 = vsyncpa [#allocation5], 0
    // Predicated region
    $region2: #{tpu_custom_call.1} parent=1 // pred_check
      _
    $region3: #{tpu_custom_call.1} parent=1 // pred_check_branch
      %21 = sbr.rel (0) target = $region5
    $region4: #{tpu_custom_call.1} parent=1 // pred_region
      %23 = vsyncadd [#allocation4], 0
      %s25 = sshll.u32 %s0, 4
      %s26 = int_to_ptr.hbm [resolvable:$true] %s25
      %s27 = sshll.u32 [#allocation3], 4
      %s28 = int_to_ptr.vmem [resolvable:$true] %s27
      %30 = dma.hbm_to_vmem [thread:$0]  %s26, 128, %s28, [#allocation4]
    $region5: #{tpu_custom_call.1} parent=1 // pred_fallthru
      _
    // Predicated region
    $region6: #{tpu_custom_call.1} parent=1 // pred_check
      _
    $region7: #{tpu_custom_call.1} parent=1 // pred_check_branch
      %32 = sbr.rel (0) target = $region9
    $region8: #{tpu_custom_call.1} parent=1 // pred_region
      %34 = vsyncadd [#allocation7], 0
      %s35 = sshll.u32 %s1, 4
      %s36 = int_to_ptr.hbm [resolvable:$true] %s35
      %s37 = sshll.u32 [#allocation6], 4
      %s38 = int_to_ptr.vmem [resolvable:$true] %s37
      %43 = dma.hbm_to_vmem [thread:$0]  %s36, 1024, %s38, [#allocation7], 256, 256, 16
    $region9: #{tpu_custom_call.1} parent=1 // pred_fallthru
      _
    // Predicated region
    $region10: #{tpu_custom_call.1} parent=1 // pred_check
      _
    $region11: #{tpu_custom_call.1} parent=1 // pred_check_branch
      %45 = sbr.rel (0) target = $region13
    $region12: #{tpu_custom_call.1} parent=1 // pred_region
      %47 = vsyncadd [#allocation7], 0
      %s49 = sshll.u32 %s2, 4
      %s50 = int_to_ptr.hbm [resolvable:$true] %s49
      %s51 = sshll.u32 [#allocation8], 4
      %s52 = int_to_ptr.vmem [resolvable:$true] %s51
      %54 = dma.hbm_to_vmem [thread:$0]  %s50, 32, %s52, [#allocation7]
    $region13: #{tpu_custom_call.1} parent=1 // pred_fallthru
      _
    // Predicated region
    $region14: #{tpu_custom_call.1} parent=1 // pred_check
      _
    $region15: #{tpu_custom_call.1} parent=1 // pred_check_branch
      %56 = sbr.rel (0) target = $region17
    $region16: #{tpu_custom_call.1} parent=1 // pred_region
      %58 = vsyncadd [#allocation10], 0
      %s59 = sshll.u32 %s3, 4
      %s60 = int_to_ptr.hbm [resolvable:$true] %s59
      %s61 = sshll.u32 [#allocation9], 4
      %s62 = int_to_ptr.vmem [resolvable:$true] %s61
      %67 = dma.hbm_to_vmem [thread:$0]  %s60, 16384, %s62, [#allocation10], 512, 512, 32
    $region17: #{tpu_custom_call.1} parent=1 // pred_fallthru
      _
    // Predicated region
    $region18: #{tpu_custom_call.1} parent=1 // pred_check
      _
    $region19: #{tpu_custom_call.1} parent=1 // pred_check_branch
      %69 = sbr.rel (0) target = $region21
    $region20: #{tpu_custom_call.1} parent=1 // pred_region
      _
    $region21: #{tpu_custom_call.1} parent=1 // pred_fallthru
      _
    // Predicated region
    $region22: #{tpu_custom_call.1} parent=1 // pred_check
      _
    $region23: #{tpu_custom_call.1} parent=1 // pred_check_branch
      %71 = sbr.rel (0) target = $region25
    $region24: #{tpu_custom_call.1} parent=1 // pred_region
      %73 = vsyncadd [#allocation10], 0
      %s74 = sshll.u32 %s5, 4
      %s75 = int_to_ptr.hbm [resolvable:$true] %s74
      %s76 = sshll.u32 [#allocation11], 4
      %s77 = int_to_ptr.vmem [resolvable:$true] %s76
      %82 = dma.hbm_to_vmem [thread:$0]  %s75, 16384, %s77, [#allocation10], 256, 256, 16
    $region25: #{tpu_custom_call.1} parent=1 // pred_fallthru
      _
    // Predicated region
    $region26: #{tpu_custom_call.1} parent=1 // pred_check
      _
    $region27: #{tpu_custom_call.1} parent=1 // pred_check_branch
      %84 = sbr.rel (0) target = $region29
    $region28: #{tpu_custom_call.1} parent=1 // pred_region
      _
    $region29: #{tpu_custom_call.1} parent=1 // pred_fallthru
      _
    // Predicated region
    $region30: #{tpu_custom_call.1} parent=1 // pred_check
      _
    $region31: #{tpu_custom_call.1} parent=1 // pred_check_branch
      %86 = sbr.rel (0) target = $region33
    $region32: #{tpu_custom_call.1} parent=1 // pred_region
      _
    $region33: #{tpu_custom_call.1} parent=1 // pred_fallthru
      _
    // Predicated region
    $region34: #{tpu_custom_call.1} parent=1 // pred_check
      _
    $region35: #{tpu_custom_call.1} parent=1 // pred_check_branch
      %88 = sbr.rel (0) target = $region37
    $region36: #{tpu_custom_call.1} parent=1 // pred_region
      _
    $region37: #{tpu_custom_call.1} parent=1 // pred_fallthru
      _
    // Predicated region
    $region38: #{tpu_custom_call.1} parent=1 // pred_check
      _
    $region39: #{tpu_custom_call.1} parent=1 // pred_check_branch
      %90 = sbr.rel (0) target = $region41
    $region40: #{tpu_custom_call.1} parent=1 // pred_region
      %92 = dma.done [#allocation4], 128
    $region41: #{tpu_custom_call.1} parent=1 // pred_fallthru
      _
    // Predicated region
    $region42: #{tpu_custom_call.1} parent=1 // pred_check
      _
    $region43: #{tpu_custom_call.1} parent=1 // pred_check_branch
      %94 = sbr.rel (0) target = $region45
    $region44: #{tpu_custom_call.1} parent=1 // pred_region
      %96 = dma.done [#allocation7], 1024
    $region45: #{tpu_custom_call.1} parent=1 // pred_fallthru
      _
    // Predicated region
    $region46: #{tpu_custom_call.1} parent=1 // pred_check
      _
    $region47: #{tpu_custom_call.1} parent=1 // pred_check_branch
      %98 = sbr.rel (0) target = $region49
    $region48: #{tpu_custom_call.1} parent=1 // pred_region
      %100 = dma.done [#allocation7], 32
    $region49: #{tpu_custom_call.1} parent=1 // pred_fallthru
      _
    // Predicated region
    $region50: #{tpu_custom_call.1} parent=1 // pred_check
      _
    $region51: #{tpu_custom_call.1} parent=1 // pred_check_branch
      %102 = sbr.rel (0) target = $region53
    $region52: #{tpu_custom_call.1} parent=1 // pred_region
      %104 = dma.done [#allocation10], 16384
    $region53: #{tpu_custom_call.1} parent=1 // pred_fallthru
      _
    // Predicated region
    $region54: #{tpu_custom_call.1} parent=1 // pred_check
      _
    $region55: #{tpu_custom_call.1} parent=1 // pred_check_branch
      %106 = sbr.rel (0) target = $region57
    $region56: #{tpu_custom_call.1} parent=1 // pred_region
      %108 = dma.done [#allocation10], 16384
    $region57: #{tpu_custom_call.1} parent=1 // pred_fallthru
      _
    %v109 = vld [vmem:[#allocation3] sm:$0xff]
    %v110 = vld [vmem:[#allocation6] sm:$0xff]
    %v111 = vld [vmem:[#allocation6 + $0x8] sm:$0xff]
    %v112 = vld [vmem:[#allocation6 + $0x10] sm:$0xff]
    %v113 = vld [vmem:[#allocation6 + $0x18] sm:$0xff]
    %v114 = vld [vmem:[#allocation6 + $0x20] sm:$0xff]
    %v115 = vld [vmem:[#allocation6 + $0x28] sm:$0xff]
    %v116 = vld [vmem:[#allocation6 + $0x30] sm:$0xff]
    %v117 = vld [vmem:[#allocation6 + $0x38] sm:$0xff]
    %v118 = vld [vmem:[#allocation8] sm:$0x3]
    %v120 = vperm.slane %v118, 0
    %v121 = vperm.slane %v118, 1
    %vm124 = vcmask 261120
    %v126 = vsel %vm124, %v109, 0
    %128 = vmatpush.msra.mxu0 0.0
    %129 = vmatpush.msra.mxu0 0.0
    %130 = vmatpush.msra.mxu0 0.0
    %131 = vmatpush.msra.mxu0 0.0
    %132 = vmatpush.msra.mxu0 0.0
    %133 = vmatpush.msra.mxu0 0.0
    %134 = vmatpush.msra.mxu0 0.0
    %135 = vmatpush.msra.mxu0 0.0
    %136 = vmatpush.msra.mxu0 0.0
    %137 = vmatpush.msra.mxu0 0.0
    %138 = vmatpush.msra.mxu0 0.0
    %139 = vmatpush.msra.mxu0 0.0
    %140 = vmatpush.msra.mxu0 %v116
    %141 = vmatpush.msra.mxu0 %v114
    %142 = vmatpush.msra.mxu0 %v112
    %143 = vmatpush.msra.mxu0 %v110
    %144 = vmatmul.f32.gmra.mxu0 %v126
    %v145 = vpop.f32.mrf.mxu0
    %v146 = vadd.f32 %v120, %v145
    %147 = vdwg.mxu0
    %148 = vmatpush.msra.mxu0 0.0
    %149 = vmatpush.msra.mxu0 0.0
    %150 = vmatpush.msra.mxu0 0.0
    %151 = vmatpush.msra.mxu0 0.0
    %152 = vmatpush.msra.mxu0 0.0
    %153 = vmatpush.msra.mxu0 0.0
    %154 = vmatpush.msra.mxu0 0.0
    %155 = vmatpush.msra.mxu0 0.0
    %156 = vmatpush.msra.mxu0 0.0
    %157 = vmatpush.msra.mxu0 0.0
    %158 = vmatpush.msra.mxu0 0.0
    %159 = vmatpush.msra.mxu0 0.0
    %160 = vmatpush.msra.mxu0 %v117
    %161 = vmatpush.msra.mxu0 %v115
    %162 = vmatpush.msra.mxu0 %v113
    %163 = vmatpush.msra.mxu0 %v111
    %164 = vmatmul.f32.gmra.mxu0 %v126
    %v165 = vpop.f32.mrf.mxu0
    %v166 = vadd.f32 %v121, %v165
    %167 = vdwg.mxu0
    %v168 = vmax.f32 %v146, 0.0
    %v169 = vmax.f32 %v166, 0.0
    %v170 = vld [vmem:[#allocation9] sm:$0xff]
    %v171 = vld [vmem:[#allocation9 + $0x8] sm:$0xff]
    %v172 = vld [vmem:[#allocation9 + $0x10] sm:$0xff]
    %v173 = vld [vmem:[#allocation9 + $0x18] sm:$0xff]
    %v174 = vld [vmem:[#allocation9 + $0x20] sm:$0xff]
    %v175 = vld [vmem:[#allocation9 + $0x28] sm:$0xff]
    %v176 = vld [vmem:[#allocation9 + $0x30] sm:$0xff]
    %v177 = vld [vmem:[#allocation9 + $0x38] sm:$0xff]
    %v178 = vld [vmem:[#allocation9 + $0x40] sm:$0xff]
    %v179 = vld [vmem:[#allocation9 + $0x48] sm:$0xff]
    %v180 = vld [vmem:[#allocation9 + $0x50] sm:$0xff]
    %v181 = vld [vmem:[#allocation9 + $0x58] sm:$0xff]
    %v182 = vld [vmem:[#allocation9 + $0x60] sm:$0xff]
    %v183 = vld [vmem:[#allocation9 + $0x68] sm:$0xff]
    %v184 = vld [vmem:[#allocation9 + $0x70] sm:$0xff]
    %v185 = vld [vmem:[#allocation9 + $0x78] sm:$0xff]
    %v186 = vld [vmem:[#allocation9 + $0x80] sm:$0xff]
    %v187 = vld [vmem:[#allocation9 + $0x88] sm:$0xff]
    %v188 = vld [vmem:[#allocation9 + $0x90] sm:$0xff]
    %v189 = vld [vmem:[#allocation9 + $0x98] sm:$0xff]
    %v190 = vld [vmem:[#allocation9 + $0xa0] sm:$0xff]
    %v191 = vld [vmem:[#allocation9 + $0xa8] sm:$0xff]
    %v192 = vld [vmem:[#allocation9 + $0xb0] sm:$0xff]
    %v193 = vld [vmem:[#allocation9 + $0xb8] sm:$0xff]
    %v194 = vld [vmem:[#allocation9 + $0xc0] sm:$0xff]
    %v195 = vld [vmem:[#allocation9 + $0xc8] sm:$0xff]
    %v196 = vld [vmem:[#allocation9 + $0xd0] sm:$0xff]
    %v197 = vld [vmem:[#allocation9 + $0xd8] sm:$0xff]
    %v198 = vld [vmem:[#allocation9 + $0xe0] sm:$0xff]
    %v199 = vld [vmem:[#allocation9 + $0xe8] sm:$0xff]
    %v200 = vld [vmem:[#allocation9 + $0xf0] sm:$0xff]
    %v201 = vld [vmem:[#allocation9 + $0xf8] sm:$0xff]
    %v202 = vld [vmem:[#allocation9 + $0x100] sm:$0xff]
    %v203 = vld [vmem:[#allocation9 + $0x108] sm:$0xff]
    %v204 = vld [vmem:[#allocation9 + $0x110] sm:$0xff]
    %v205 = vld [vmem:[#allocation9 + $0x118] sm:$0xff]
    %v206 = vld [vmem:[#allocation9 + $0x120] sm:$0xff]
    %v207 = vld [vmem:[#allocation9 + $0x128] sm:$0xff]
    %v208 = vld [vmem:[#allocation9 + $0x130] sm:$0xff]
    %v209 = vld [vmem:[#allocation9 + $0x138] sm:$0xff]
    %v210 = vld [vmem:[#allocation9 + $0x140] sm:$0xff]
    %v211 = vld [vmem:[#allocation9 + $0x148] sm:$0xff]
    %v212 = vld [vmem:[#allocation9 + $0x150] sm:$0xff]
    %v213 = vld [vmem:[#allocation9 + $0x158] sm:$0xff]
    %v214 = vld [vmem:[#allocation9 + $0x160] sm:$0xff]
    %v215 = vld [vmem:[#allocation9 + $0x168] sm:$0xff]
    %v216 = vld [vmem:[#allocation9 + $0x170] sm:$0xff]
    %v217 = vld [vmem:[#allocation9 + $0x178] sm:$0xff]
    %v218 = vld [vmem:[#allocation9 + $0x180] sm:$0xff]
    %v219 = vld [vmem:[#allocation9 + $0x188] sm:$0xff]
    %v220 = vld [vmem:[#allocation9 + $0x190] sm:$0xff]
    %v221 = vld [vmem:[#allocation9 + $0x198] sm:$0xff]
    %v222 = vld [vmem:[#allocation9 + $0x1a0] sm:$0xff]
    %v223 = vld [vmem:[#allocation9 + $0x1a8] sm:$0xff]
    %v224 = vld [vmem:[#allocation9 + $0x1b0] sm:$0xff]
    %v225 = vld [vmem:[#allocation9 + $0x1b8] sm:$0xff]
    %v226 = vld [vmem:[#allocation9 + $0x1c0] sm:$0xff]
    %v227 = vld [vmem:[#allocation9 + $0x1c8] sm:$0xff]
    %v228 = vld [vmem:[#allocation9 + $0x1d0] sm:$0xff]
    %v229 = vld [vmem:[#allocation9 + $0x1d8] sm:$0xff]
    %v230 = vld [vmem:[#allocation9 + $0x1e0] sm:$0xff]
    %v231 = vld [vmem:[#allocation9 + $0x1e8] sm:$0xff]
    %v232 = vld [vmem:[#allocation9 + $0x1f0] sm:$0xff]
    %v233 = vld [vmem:[#allocation9 + $0x1f8] sm:$0xff]
    %v234 = vld [vmem:[#allocation9 + $0x200] sm:$0xff]
    %v235 = vld [vmem:[#allocation9 + $0x208] sm:$0xff]
    %v236 = vld [vmem:[#allocation9 + $0x210] sm:$0xff]
    %v237 = vld [vmem:[#allocation9 + $0x218] sm:$0xff]
    %v238 = vld [vmem:[#allocation9 + $0x220] sm:$0xff]
    %v239 = vld [vmem:[#allocation9 + $0x228] sm:$0xff]
    %v240 = vld [vmem:[#allocation9 + $0x230] sm:$0xff]
    %v241 = vld [vmem:[#allocation9 + $0x238] sm:$0xff]
    %v242 = vld [vmem:[#allocation9 + $0x240] sm:$0xff]
    %v243 = vld [vmem:[#allocation9 + $0x248] sm:$0xff]
    %v244 = vld [vmem:[#allocation9 + $0x250] sm:$0xff]
    %v245 = vld [vmem:[#allocation9 + $0x258] sm:$0xff]
    %v246 = vld [vmem:[#allocation9 + $0x260] sm:$0xff]
    %v247 = vld [vmem:[#allocation9 + $0x268] sm:$0xff]
    %v248 = vld [vmem:[#allocation9 + $0x270] sm:$0xff]
    %v249 = vld [vmem:[#allocation9 + $0x278] sm:$0xff]
    %v250 = vld [vmem:[#allocation9 + $0x280] sm:$0xff]
    %v251 = vld [vmem:[#allocation9 + $0x288] sm:$0xff]
    %v252 = vld [vmem:[#allocation9 + $0x290] sm:$0xff]
    %v253 = vld [vmem:[#allocation9 + $0x298] sm:$0xff]
    %v254 = vld [vmem:[#allocation9 + $0x2a0] sm:$0xff]
    %v255 = vld [vmem:[#allocation9 + $0x2a8] sm:$0xff]
    %v256 = vld [vmem:[#allocation9 + $0x2b0] sm:$0xff]
    %v257 = vld [vmem:[#allocation9 + $0x2b8] sm:$0xff]
    %v258 = vld [vmem:[#allocation9 + $0x2c0] sm:$0xff]
    %v259 = vld [vmem:[#allocation9 + $0x2c8] sm:$0xff]
    %v260 = vld [vmem:[#allocation9 + $0x2d0] sm:$0xff]
    %v261 = vld [vmem:[#allocation9 + $0x2d8] sm:$0xff]
    %v262 = vld [vmem:[#allocation9 + $0x2e0] sm:$0xff]
    %v263 = vld [vmem:[#allocation9 + $0x2e8] sm:$0xff]
    %v264 = vld [vmem:[#allocation9 + $0x2f0] sm:$0xff]
    %v265 = vld [vmem:[#allocation9 + $0x2f8] sm:$0xff]
    %v266 = vld [vmem:[#allocation9 + $0x300] sm:$0xff]
    %v267 = vld [vmem:[#allocation9 + $0x308] sm:$0xff]
    %v268 = vld [vmem:[#allocation9 + $0x310] sm:$0xff]
    %v269 = vld [vmem:[#allocation9 + $0x318] sm:$0xff]
    %v270 = vld [vmem:[#allocation9 + $0x320] sm:$0xff]
    %v271 = vld [vmem:[#allocation9 + $0x328] sm:$0xff]
    %v272 = vld [vmem:[#allocation9 + $0x330] sm:$0xff]
    %v273 = vld [vmem:[#allocation9 + $0x338] sm:$0xff]
    %v274 = vld [vmem:[#allocation9 + $0x340] sm:$0xff]
    %v275 = vld [vmem:[#allocation9 + $0x348] sm:$0xff]
    %v276 = vld [vmem:[#allocation9 + $0x350] sm:$0xff]
    %v277 = vld [vmem:[#allocation9 + $0x358] sm:$0xff]
    %v278 = vld [vmem:[#allocation9 + $0x360] sm:$0xff]
    %v279 = vld [vmem:[#allocation9 + $0x368] sm:$0xff]
    %v280 = vld [vmem:[#allocation9 + $0x370] sm:$0xff]
    %v281 = vld [vmem:[#allocation9 + $0x378] sm:$0xff]
    %v282 = vld [vmem:[#allocation9 + $0x380] sm:$0xff]
    %v283 = vld [vmem:[#allocation9 + $0x388] sm:$0xff]
    %v284 = vld [vmem:[#allocation9 + $0x390] sm:$0xff]
    %v285 = vld [vmem:[#allocation9 + $0x398] sm:$0xff]
    %v286 = vld [vmem:[#allocation9 + $0x3a0] sm:$0xff]
    %v287 = vld [vmem:[#allocation9 + $0x3a8] sm:$0xff]
    %v288 = vld [vmem:[#allocation9 + $0x3b0] sm:$0xff]
    %v289 = vld [vmem:[#allocation9 + $0x3b8] sm:$0xff]
    %v290 = vld [vmem:[#allocation9 + $0x3c0] sm:$0xff]
    %v291 = vld [vmem:[#allocation9 + $0x3c8] sm:$0xff]
    %v292 = vld [vmem:[#allocation9 + $0x3d0] sm:$0xff]
    %v293 = vld [vmem:[#allocation9 + $0x3d8] sm:$0xff]
    %v294 = vld [vmem:[#allocation9 + $0x3e0] sm:$0xff]
    %v295 = vld [vmem:[#allocation9 + $0x3e8] sm:$0xff]
    %v296 = vld [vmem:[#allocation9 + $0x3f0] sm:$0xff]
    %v297 = vld [vmem:[#allocation9 + $0x3f8] sm:$0xff]
    %v298 = vld [vmem:[%s4] sm:$0xf]
    %v300 = vperm.slane %v298, 0
    %v301 = vperm.slane %v298, 1
    %v302 = vperm.slane %v298, 2
    %v303 = vperm.slane %v298, 3
    %308 = vmatpush.msra.mxu0 %v230
    %309 = vmatpush.msra.mxu0 %v226
    %310 = vmatpush.msra.mxu0 %v222
    %311 = vmatpush.msra.mxu0 %v218
    %312 = vmatpush.msra.mxu0 %v214
    %313 = vmatpush.msra.mxu0 %v210
    %314 = vmatpush.msra.mxu0 %v206
    %315 = vmatpush.msra.mxu0 %v202
    %316 = vmatpush.msra.mxu0 %v198
    %317 = vmatpush.msra.mxu0 %v194
    %318 = vmatpush.msra.mxu0 %v190
    %319 = vmatpush.msra.mxu0 %v186
    %320 = vmatpush.msra.mxu0 %v182
    %321 = vmatpush.msra.mxu0 %v178
    %322 = vmatpush.msra.mxu0 %v174
    %323 = vmatpush.msra.mxu0 %v170
    %324 = vmatmul.f32.gmra.mxu0 %v168
    %v325 = vpop.f32.mrf.mxu0
    %v326 = vadd.f32 %v300, %v325
    %327 = vdwg.mxu0
    %328 = vmatpush.msra.mxu0 %v294
    %329 = vmatpush.msra.mxu0 %v290
    %330 = vmatpush.msra.mxu0 %v286
    %331 = vmatpush.msra.mxu0 %v282
    %332 = vmatpush.msra.mxu0 %v278
    %333 = vmatpush.msra.mxu0 %v274
    %334 = vmatpush.msra.mxu0 %v270
    %335 = vmatpush.msra.mxu0 %v266
    %336 = vmatpush.msra.mxu0 %v262
    %337 = vmatpush.msra.mxu0 %v258
    %338 = vmatpush.msra.mxu0 %v254
    %339 = vmatpush.msra.mxu0 %v250
    %340 = vmatpush.msra.mxu0 %v246
    %341 = vmatpush.msra.mxu0 %v242
    %342 = vmatpush.msra.mxu0 %v238
    %343 = vmatpush.msra.mxu0 %v234
    %344 = vmatmul.f32.gmra.mxu0 %v169
    %v345 = vpop.f32.mrf.mxu0
    %v346 = vadd.f32 %v326, %v345
    %347 = vdwg.mxu0
    %348 = vmatpush.msra.mxu0 %v231
    %349 = vmatpush.msra.mxu0 %v227
    %350 = vmatpush.msra.mxu0 %v223
    %351 = vmatpush.msra.mxu0 %v219
    %352 = vmatpush.msra.mxu0 %v215
    %353 = vmatpush.msra.mxu0 %v211
    %354 = vmatpush.msra.mxu0 %v207
    %355 = vmatpush.msra.mxu0 %v203
    %356 = vmatpush.msra.mxu0 %v199
    %357 = vmatpush.msra.mxu0 %v195
    %358 = vmatpush.msra.mxu0 %v191
    %359 = vmatpush.msra.mxu0 %v187
    %360 = vmatpush.msra.mxu0 %v183
    %361 = vmatpush.msra.mxu0 %v179
    %362 = vmatpush.msra.mxu0 %v175
    %363 = vmatpush.msra.mxu0 %v171
    %364 = vmatmul.f32.gmra.mxu0 %v168
    %v365 = vpop.f32.mrf.mxu0
    %v366 = vadd.f32 %v301, %v365
    %367 = vdwg.mxu0
    %368 = vmatpush.msra.mxu0 %v295
    %369 = vmatpush.msra.mxu0 %v291
    %370 = vmatpush.msra.mxu0 %v287
    %371 = vmatpush.msra.mxu0 %v283
    %372 = vmatpush.msra.mxu0 %v279
    %373 = vmatpush.msra.mxu0 %v275
    %374 = vmatpush.msra.mxu0 %v271
    %375 = vmatpush.msra.mxu0 %v267
    %376 = vmatpush.msra.mxu0 %v263
    %377 = vmatpush.msra.mxu0 %v259
    %378 = vmatpush.msra.mxu0 %v255
    %379 = vmatpush.msra.mxu0 %v251
    %380 = vmatpush.msra.mxu0 %v247
    %381 = vmatpush.msra.mxu0 %v243
    %382 = vmatpush.msra.mxu0 %v239
    %383 = vmatpush.msra.mxu0 %v235
    %384 = vmatmul.f32.gmra.mxu0 %v169
    %v385 = vpop.f32.mrf.mxu0
    %v386 = vadd.f32 %v366, %v385
    %387 = vdwg.mxu0
    %388 = vmatpush.msra.mxu0 %v232
    %389 = vmatpush.msra.mxu0 %v228
    %390 = vmatpush.msra.mxu0 %v224
    %391 = vmatpush.msra.mxu0 %v220
    %392 = vmatpush.msra.mxu0 %v216
    %393 = vmatpush.msra.mxu0 %v212
    %394 = vmatpush.msra.mxu0 %v208
    %395 = vmatpush.msra.mxu0 %v204
    %396 = vmatpush.msra.mxu0 %v200
    %397 = vmatpush.msra.mxu0 %v196
    %398 = vmatpush.msra.mxu0 %v192
    %399 = vmatpush.msra.mxu0 %v188
    %400 = vmatpush.msra.mxu0 %v184
    %401 = vmatpush.msra.mxu0 %v180
    %402 = vmatpush.msra.mxu0 %v176
    %403 = vmatpush.msra.mxu0 %v172
    %404 = vmatmul.f32.gmra.mxu0 %v168
    %v405 = vpop.f32.mrf.mxu0
    %v406 = vadd.f32 %v302, %v405
    %407 = vdwg.mxu0
    %408 = vmatpush.msra.mxu0 %v296
    %409 = vmatpush.msra.mxu0 %v292
    %410 = vmatpush.msra.mxu0 %v288
    %411 = vmatpush.msra.mxu0 %v284
    %412 = vmatpush.msra.mxu0 %v280
    %413 = vmatpush.msra.mxu0 %v276
    %414 = vmatpush.msra.mxu0 %v272
    %415 = vmatpush.msra.mxu0 %v268
    %416 = vmatpush.msra.mxu0 %v264
    %417 = vmatpush.msra.mxu0 %v260
    %418 = vmatpush.msra.mxu0 %v256
    %419 = vmatpush.msra.mxu0 %v252
    %420 = vmatpush.msra.mxu0 %v248
    %421 = vmatpush.msra.mxu0 %v244
    %422 = vmatpush.msra.mxu0 %v240
    %423 = vmatpush.msra.mxu0 %v236
    %424 = vmatmul.f32.gmra.mxu0 %v169
    %v425 = vpop.f32.mrf.mxu0
    %v426 = vadd.f32 %v406, %v425
    %427 = vdwg.mxu0
    %428 = vmatpush.msra.mxu0 %v233
    %429 = vmatpush.msra.mxu0 %v229
    %430 = vmatpush.msra.mxu0 %v225
    %431 = vmatpush.msra.mxu0 %v221
    %432 = vmatpush.msra.mxu0 %v217
    %433 = vmatpush.msra.mxu0 %v213
    %434 = vmatpush.msra.mxu0 %v209
    %435 = vmatpush.msra.mxu0 %v205
    %436 = vmatpush.msra.mxu0 %v201
    %437 = vmatpush.msra.mxu0 %v197
    %438 = vmatpush.msra.mxu0 %v193
    %439 = vmatpush.msra.mxu0 %v189
    %440 = vmatpush.msra.mxu0 %v185
    %441 = vmatpush.msra.mxu0 %v181
    %442 = vmatpush.msra.mxu0 %v177
    %443 = vmatpush.msra.mxu0 %v173
    %444 = vmatmul.f32.gmra.mxu0 %v168
    %v445 = vpop.f32.mrf.mxu0
    %v446 = vadd.f32 %v303, %v445
    %447 = vdwg.mxu0
    %448 = vmatpush.msra.mxu0 %v297
    %449 = vmatpush.msra.mxu0 %v293
    %450 = vmatpush.msra.mxu0 %v289
    %451 = vmatpush.msra.mxu0 %v285
    %452 = vmatpush.msra.mxu0 %v281
    %453 = vmatpush.msra.mxu0 %v277
    %454 = vmatpush.msra.mxu0 %v273
    %455 = vmatpush.msra.mxu0 %v269
    %456 = vmatpush.msra.mxu0 %v265
    %457 = vmatpush.msra.mxu0 %v261
    %458 = vmatpush.msra.mxu0 %v257
    %459 = vmatpush.msra.mxu0 %v253
    %460 = vmatpush.msra.mxu0 %v249
    %461 = vmatpush.msra.mxu0 %v245
    %462 = vmatpush.msra.mxu0 %v241
    %463 = vmatpush.msra.mxu0 %v237
    %464 = vmatmul.f32.gmra.mxu0 %v169
    %v465 = vpop.f32.mrf.mxu0
    %v466 = vadd.f32 %v446, %v465
    %467 = vdwg.mxu0
    %v468 = vmax.f32 %v346, 0.0
    %v469 = vmax.f32 %v386, 0.0
    %v470 = vmax.f32 %v426, 0.0
    %v471 = vmax.f32 %v466, 0.0
    %v472 = vld [vmem:[#allocation11] sm:$0xff]
    %v473 = vld [vmem:[#allocation11 + $0x8] sm:$0xff]
    %v474 = vld [vmem:[#allocation11 + $0x10] sm:$0xff]
    %v475 = vld [vmem:[#allocation11 + $0x18] sm:$0xff]
    %v476 = vld [vmem:[#allocation11 + $0x20] sm:$0xff]
    %v477 = vld [vmem:[#allocation11 + $0x28] sm:$0xff]
    %v478 = vld [vmem:[#allocation11 + $0x30] sm:$0xff]
    %v479 = vld [vmem:[#allocation11 + $0x38] sm:$0xff]
    %v480 = vld [vmem:[#allocation11 + $0x40] sm:$0xff]
    %v481 = vld [vmem:[#allocation11 + $0x48] sm:$0xff]
    %v482 = vld [vmem:[#allocation11 + $0x50] sm:$0xff]
    %v483 = vld [vmem:[#allocation11 + $0x58] sm:$0xff]
    %v484 = vld [vmem:[#allocation11 + $0x60] sm:$0xff]
    %v485 = vld [vmem:[#allocation11 + $0x68] sm:$0xff]
    %v486 = vld [vmem:[#allocation11 + $0x70] sm:$0xff]
    %v487 = vld [vmem:[#allocation11 + $0x78] sm:$0xff]
    %v488 = vld [vmem:[#allocation11 + $0x80] sm:$0xff]
    %v489 = vld [vmem:[#allocation11 + $0x88] sm:$0xff]
    %v490 = vld [vmem:[#allocation11 + $0x90] sm:$0xff]
    %v491 = vld [vmem:[#allocation11 + $0x98] sm:$0xff]
    %v492 = vld [vmem:[#allocation11 + $0xa0] sm:$0xff]
    %v493 = vld [vmem:[#allocation11 + $0xa8] sm:$0xff]
    %v494 = vld [vmem:[#allocation11 + $0xb0] sm:$0xff]
    %v495 = vld [vmem:[#allocation11 + $0xb8] sm:$0xff]
    %v496 = vld [vmem:[#allocation11 + $0xc0] sm:$0xff]
    %v497 = vld [vmem:[#allocation11 + $0xc8] sm:$0xff]
    %v498 = vld [vmem:[#allocation11 + $0xd0] sm:$0xff]
    %v499 = vld [vmem:[#allocation11 + $0xd8] sm:$0xff]
    %v500 = vld [vmem:[#allocation11 + $0xe0] sm:$0xff]
    %v501 = vld [vmem:[#allocation11 + $0xe8] sm:$0xff]
    %v502 = vld [vmem:[#allocation11 + $0xf0] sm:$0xff]
    %v503 = vld [vmem:[#allocation11 + $0xf8] sm:$0xff]
    %v504 = vld [vmem:[#allocation11 + $0x100] sm:$0xff]
    %v505 = vld [vmem:[#allocation11 + $0x108] sm:$0xff]
    %v506 = vld [vmem:[#allocation11 + $0x110] sm:$0xff]
    %v507 = vld [vmem:[#allocation11 + $0x118] sm:$0xff]
    %v508 = vld [vmem:[#allocation11 + $0x120] sm:$0xff]
    %v509 = vld [vmem:[#allocation11 + $0x128] sm:$0xff]
    %v510 = vld [vmem:[#allocation11 + $0x130] sm:$0xff]
    %v511 = vld [vmem:[#allocation11 + $0x138] sm:$0xff]
    %v512 = vld [vmem:[#allocation11 + $0x140] sm:$0xff]
    %v513 = vld [vmem:[#allocation11 + $0x148] sm:$0xff]
    %v514 = vld [vmem:[#allocation11 + $0x150] sm:$0xff]
    %v515 = vld [vmem:[#allocation11 + $0x158] sm:$0xff]
    %v516 = vld [vmem:[#allocation11 + $0x160] sm:$0xff]
    %v517 = vld [vmem:[#allocation11 + $0x168] sm:$0xff]
    %v518 = vld [vmem:[#allocation11 + $0x170] sm:$0xff]
    %v519 = vld [vmem:[#allocation11 + $0x178] sm:$0xff]
    %v520 = vld [vmem:[#allocation11 + $0x180] sm:$0xff]
    %v521 = vld [vmem:[#allocation11 + $0x188] sm:$0xff]
    %v522 = vld [vmem:[#allocation11 + $0x190] sm:$0xff]
    %v523 = vld [vmem:[#allocation11 + $0x198] sm:$0xff]
    %v524 = vld [vmem:[#allocation11 + $0x1a0] sm:$0xff]
    %v525 = vld [vmem:[#allocation11 + $0x1a8] sm:$0xff]
    %v526 = vld [vmem:[#allocation11 + $0x1b0] sm:$0xff]
    %v527 = vld [vmem:[#allocation11 + $0x1b8] sm:$0xff]
    %v528 = vld [vmem:[#allocation11 + $0x1c0] sm:$0xff]
    %v529 = vld [vmem:[#allocation11 + $0x1c8] sm:$0xff]
    %v530 = vld [vmem:[#allocation11 + $0x1d0] sm:$0xff]
    %v531 = vld [vmem:[#allocation11 + $0x1d8] sm:$0xff]
    %v532 = vld [vmem:[#allocation11 + $0x1e0] sm:$0xff]
    %v533 = vld [vmem:[#allocation11 + $0x1e8] sm:$0xff]
    %v534 = vld [vmem:[#allocation11 + $0x1f0] sm:$0xff]
    %v535 = vld [vmem:[#allocation11 + $0x1f8] sm:$0xff]
    %v536 = vld [vmem:[#allocation11 + $0x200] sm:$0xff]
    %v537 = vld [vmem:[#allocation11 + $0x208] sm:$0xff]
    %v538 = vld [vmem:[#allocation11 + $0x210] sm:$0xff]
    %v539 = vld [vmem:[#allocation11 + $0x218] sm:$0xff]
    %v540 = vld [vmem:[#allocation11 + $0x220] sm:$0xff]
    %v541 = vld [vmem:[#allocation11 + $0x228] sm:$0xff]
    %v542 = vld [vmem:[#allocation11 + $0x230] sm:$0xff]
    %v543 = vld [vmem:[#allocation11 + $0x238] sm:$0xff]
    %v544 = vld [vmem:[#allocation11 + $0x240] sm:$0xff]
    %v545 = vld [vmem:[#allocation11 + $0x248] sm:$0xff]
    %v546 = vld [vmem:[#allocation11 + $0x250] sm:$0xff]
    %v547 = vld [vmem:[#allocation11 + $0x258] sm:$0xff]
    %v548 = vld [vmem:[#allocation11 + $0x260] sm:$0xff]
    %v549 = vld [vmem:[#allocation11 + $0x268] sm:$0xff]
    %v550 = vld [vmem:[#allocation11 + $0x270] sm:$0xff]
    %v551 = vld [vmem:[#allocation11 + $0x278] sm:$0xff]
    %v552 = vld [vmem:[#allocation11 + $0x280] sm:$0xff]
    %v553 = vld [vmem:[#allocation11 + $0x288] sm:$0xff]
    %v554 = vld [vmem:[#allocation11 + $0x290] sm:$0xff]
    %v555 = vld [vmem:[#allocation11 + $0x298] sm:$0xff]
    %v556 = vld [vmem:[#allocation11 + $0x2a0] sm:$0xff]
    %v557 = vld [vmem:[#allocation11 + $0x2a8] sm:$0xff]
    %v558 = vld [vmem:[#allocation11 + $0x2b0] sm:$0xff]
    %v559 = vld [vmem:[#allocation11 + $0x2b8] sm:$0xff]
    %v560 = vld [vmem:[#allocation11 + $0x2c0] sm:$0xff]
    %v561 = vld [vmem:[#allocation11 + $0x2c8] sm:$0xff]
    %v562 = vld [vmem:[#allocation11 + $0x2d0] sm:$0xff]
    %v563 = vld [vmem:[#allocation11 + $0x2d8] sm:$0xff]
    %v564 = vld [vmem:[#allocation11 + $0x2e0] sm:$0xff]
    %v565 = vld [vmem:[#allocation11 + $0x2e8] sm:$0xff]
    %v566 = vld [vmem:[#allocation11 + $0x2f0] sm:$0xff]
    %v567 = vld [vmem:[#allocation11 + $0x2f8] sm:$0xff]
    %v568 = vld [vmem:[#allocation11 + $0x300] sm:$0xff]
    %v569 = vld [vmem:[#allocation11 + $0x308] sm:$0xff]
    %v570 = vld [vmem:[#allocation11 + $0x310] sm:$0xff]
    %v571 = vld [vmem:[#allocation11 + $0x318] sm:$0xff]
    %v572 = vld [vmem:[#allocation11 + $0x320] sm:$0xff]
    %v573 = vld [vmem:[#allocation11 + $0x328] sm:$0xff]
    %v574 = vld [vmem:[#allocation11 + $0x330] sm:$0xff]
    %v575 = vld [vmem:[#allocation11 + $0x338] sm:$0xff]
    %v576 = vld [vmem:[#allocation11 + $0x340] sm:$0xff]
    %v577 = vld [vmem:[#allocation11 + $0x348] sm:$0xff]
    %v578 = vld [vmem:[#allocation11 + $0x350] sm:$0xff]
    %v579 = vld [vmem:[#allocation11 + $0x358] sm:$0xff]
    %v580 = vld [vmem:[#allocation11 + $0x360] sm:$0xff]
    %v581 = vld [vmem:[#allocation11 + $0x368] sm:$0xff]
    %v582 = vld [vmem:[#allocation11 + $0x370] sm:$0xff]
    %v583 = vld [vmem:[#allocation11 + $0x378] sm:$0xff]
    %v584 = vld [vmem:[#allocation11 + $0x380] sm:$0xff]
    %v585 = vld [vmem:[#allocation11 + $0x388] sm:$0xff]
    %v586 = vld [vmem:[#allocation11 + $0x390] sm:$0xff]
    %v587 = vld [vmem:[#allocation11 + $0x398] sm:$0xff]
    %v588 = vld [vmem:[#allocation11 + $0x3a0] sm:$0xff]
    %v589 = vld [vmem:[#allocation11 + $0x3a8] sm:$0xff]
    %v590 = vld [vmem:[#allocation11 + $0x3b0] sm:$0xff]
    %v591 = vld [vmem:[#allocation11 + $0x3b8] sm:$0xff]
    %v592 = vld [vmem:[#allocation11 + $0x3c0] sm:$0xff]
    %v593 = vld [vmem:[#allocation11 + $0x3c8] sm:$0xff]
    %v594 = vld [vmem:[#allocation11 + $0x3d0] sm:$0xff]
    %v595 = vld [vmem:[#allocation11 + $0x3d8] sm:$0xff]
    %v596 = vld [vmem:[#allocation11 + $0x3e0] sm:$0xff]
    %v597 = vld [vmem:[#allocation11 + $0x3e8] sm:$0xff]
    %v598 = vld [vmem:[#allocation11 + $0x3f0] sm:$0xff]
    %v599 = vld [vmem:[#allocation11 + $0x3f8] sm:$0xff]
    %v600 = vld [vmem:[%s6] sm:$0x3]
    %v602 = vperm.slane %v600, 0
    %v603 = vperm.slane %v600, 1
    %606 = vmatpush.msra.mxu0 %v502
    %607 = vmatpush.msra.mxu0 %v500
    %608 = vmatpush.msra.mxu0 %v498
    %609 = vmatpush.msra.mxu0 %v496
    %610 = vmatpush.msra.mxu0 %v494
    %611 = vmatpush.msra.mxu0 %v492
    %612 = vmatpush.msra.mxu0 %v490
    %613 = vmatpush.msra.mxu0 %v488
    %614 = vmatpush.msra.mxu0 %v486
    %615 = vmatpush.msra.mxu0 %v484
    %616 = vmatpush.msra.mxu0 %v482
    %617 = vmatpush.msra.mxu0 %v480
    %618 = vmatpush.msra.mxu0 %v478
    %619 = vmatpush.msra.mxu0 %v476
    %620 = vmatpush.msra.mxu0 %v474
    %621 = vmatpush.msra.mxu0 %v472
    %622 = vmatmul.f32.gmra.mxu0 %v468
    %v623 = vpop.f32.mrf.mxu0
    %v624 = vadd.f32 %v602, %v623
    %625 = vdwg.mxu0
    %626 = vmatpush.msra.mxu0 %v534
    %627 = vmatpush.msra.mxu0 %v532
    %628 = vmatpush.msra.mxu0 %v530
    %629 = vmatpush.msra.mxu0 %v528
    %630 = vmatpush.msra.mxu0 %v526
    %631 = vmatpush.msra.mxu0 %v524
    %632 = vmatpush.msra.mxu0 %v522
    %633 = vmatpush.msra.mxu0 %v520
    %634 = vmatpush.msra.mxu0 %v518
    %635 = vmatpush.msra.mxu0 %v516
    %636 = vmatpush.msra.mxu0 %v514
    %637 = vmatpush.msra.mxu0 %v512
    %638 = vmatpush.msra.mxu0 %v510
    %639 = vmatpush.msra.mxu0 %v508
    %640 = vmatpush.msra.mxu0 %v506
    %641 = vmatpush.msra.mxu0 %v504
    %642 = vmatmul.f32.gmra.mxu0 %v469
    %v643 = vpop.f32.mrf.mxu0
    %v644 = vadd.f32 %v624, %v643
    %645 = vdwg.mxu0
    %646 = vmatpush.msra.mxu0 %v566
    %647 = vmatpush.msra.mxu0 %v564
    %648 = vmatpush.msra.mxu0 %v562
    %649 = vmatpush.msra.mxu0 %v560
    %650 = vmatpush.msra.mxu0 %v558
    %651 = vmatpush.msra.mxu0 %v556
    %652 = vmatpush.msra.mxu0 %v554
    %653 = vmatpush.msra.mxu0 %v552
    %654 = vmatpush.msra.mxu0 %v550
    %655 = vmatpush.msra.mxu0 %v548
    %656 = vmatpush.msra.mxu0 %v546
    %657 = vmatpush.msra.mxu0 %v544
    %658 = vmatpush.msra.mxu0 %v542
    %659 = vmatpush.msra.mxu0 %v540
    %660 = vmatpush.msra.mxu0 %v538
    %661 = vmatpush.msra.mxu0 %v536
    %662 = vmatmul.f32.gmra.mxu0 %v470
    %v663 = vpop.f32.mrf.mxu0
    %v664 = vadd.f32 %v644, %v663
    %665 = vdwg.mxu0
    %666 = vmatpush.msra.mxu0 %v598
    %667 = vmatpush.msra.mxu0 %v596
    %668 = vmatpush.msra.mxu0 %v594
    %669 = vmatpush.msra.mxu0 %v592
    %670 = vmatpush.msra.mxu0 %v590
    %671 = vmatpush.msra.mxu0 %v588
    %672 = vmatpush.msra.mxu0 %v586
    %673 = vmatpush.msra.mxu0 %v584
    %674 = vmatpush.msra.mxu0 %v582
    %675 = vmatpush.msra.mxu0 %v580
    %676 = vmatpush.msra.mxu0 %v578
    %677 = vmatpush.msra.mxu0 %v576
    %678 = vmatpush.msra.mxu0 %v574
    %679 = vmatpush.msra.mxu0 %v572
    %680 = vmatpush.msra.mxu0 %v570
    %681 = vmatpush.msra.mxu0 %v568
    %682 = vmatmul.f32.gmra.mxu0 %v471
    %v683 = vpop.f32.mrf.mxu0
    %v684 = vadd.f32 %v664, %v683
    %685 = vdwg.mxu0
    %686 = vmatpush.msra.mxu0 %v503
    %687 = vmatpush.msra.mxu0 %v501
    %688 = vmatpush.msra.mxu0 %v499
    %689 = vmatpush.msra.mxu0 %v497
    %690 = vmatpush.msra.mxu0 %v495
    %691 = vmatpush.msra.mxu0 %v493
    %692 = vmatpush.msra.mxu0 %v491
    %693 = vmatpush.msra.mxu0 %v489
    %694 = vmatpush.msra.mxu0 %v487
    %695 = vmatpush.msra.mxu0 %v485
    %696 = vmatpush.msra.mxu0 %v483
    %697 = vmatpush.msra.mxu0 %v481
    %698 = vmatpush.msra.mxu0 %v479
    %699 = vmatpush.msra.mxu0 %v477
    %700 = vmatpush.msra.mxu0 %v475
    %701 = vmatpush.msra.mxu0 %v473
    %702 = vmatmul.f32.gmra.mxu0 %v468
    %v703 = vpop.f32.mrf.mxu0
    %v704 = vadd.f32 %v603, %v703
    %705 = vdwg.mxu0
    %706 = vmatpush.msra.mxu0 %v535
    %707 = vmatpush.msra.mxu0 %v533
    %708 = vmatpush.msra.mxu0 %v531
    %709 = vmatpush.msra.mxu0 %v529
    %710 = vmatpush.msra.mxu0 %v527
    %711 = vmatpush.msra.mxu0 %v525
    %712 = vmatpush.msra.mxu0 %v523
    %713 = vmatpush.msra.mxu0 %v521
    %714 = vmatpush.msra.mxu0 %v519
    %715 = vmatpush.msra.mxu0 %v517
    %716 = vmatpush.msra.mxu0 %v515
    %717 = vmatpush.msra.mxu0 %v513
    %718 = vmatpush.msra.mxu0 %v511
    %719 = vmatpush.msra.mxu0 %v509
    %720 = vmatpush.msra.mxu0 %v507
    %721 = vmatpush.msra.mxu0 %v505
    %722 = vmatmul.f32.gmra.mxu0 %v469
    %v723 = vpop.f32.mrf.mxu0
    %v724 = vadd.f32 %v704, %v723
    %725 = vdwg.mxu0
    %726 = vmatpush.msra.mxu0 %v567
    %727 = vmatpush.msra.mxu0 %v565
    %728 = vmatpush.msra.mxu0 %v563
    %729 = vmatpush.msra.mxu0 %v561
    %730 = vmatpush.msra.mxu0 %v559
    %731 = vmatpush.msra.mxu0 %v557
    %732 = vmatpush.msra.mxu0 %v555
    %733 = vmatpush.msra.mxu0 %v553
    %734 = vmatpush.msra.mxu0 %v551
    %735 = vmatpush.msra.mxu0 %v549
    %736 = vmatpush.msra.mxu0 %v547
    %737 = vmatpush.msra.mxu0 %v545
    %738 = vmatpush.msra.mxu0 %v543
    %739 = vmatpush.msra.mxu0 %v541
    %740 = vmatpush.msra.mxu0 %v539
    %741 = vmatpush.msra.mxu0 %v537
    %742 = vmatmul.f32.gmra.mxu0 %v470
    %v743 = vpop.f32.mrf.mxu0
    %v744 = vadd.f32 %v724, %v743
    %745 = vdwg.mxu0
    %746 = vmatpush.msra.mxu0 %v599
    %747 = vmatpush.msra.mxu0 %v597
    %748 = vmatpush.msra.mxu0 %v595
    %749 = vmatpush.msra.mxu0 %v593
    %750 = vmatpush.msra.mxu0 %v591
    %751 = vmatpush.msra.mxu0 %v589
    %752 = vmatpush.msra.mxu0 %v587
    %753 = vmatpush.msra.mxu0 %v585
    %754 = vmatpush.msra.mxu0 %v583
    %755 = vmatpush.msra.mxu0 %v581
    %756 = vmatpush.msra.mxu0 %v579
    %757 = vmatpush.msra.mxu0 %v577
    %758 = vmatpush.msra.mxu0 %v575
    %759 = vmatpush.msra.mxu0 %v573
    %760 = vmatpush.msra.mxu0 %v571
    %761 = vmatpush.msra.mxu0 %v569
    %762 = vmatmul.f32.gmra.mxu0 %v471
    %v763 = vpop.f32.mrf.mxu0
    %v764 = vadd.f32 %v744, %v763
    %765 = vdwg.mxu0
    %v766 = vmax.f32 %v684, 0.0
    %v767 = vmax.f32 %v764, 0.0
    %v768 = vld [vmem:[%s7] sm:$0x3]
    %v770 = vperm.slane %v768, 0
    %v771 = vperm.slane %v768, 1
    %v774 = vmul.f32 %v766, %v770
    %v775 = vmul.f32 %v767, %v771
    %v776 = vadd.f32 %v774, %v775
    %777 = vadd.xlane.f32.xlu0 %v776
    %v778 = vpop.xlane.xlu0 %777
    %v779 = vld [vmem:[#allocation2] sm:$0x1]
    %v781 = vperm.slane %v779, 0
    %v783 = vadd.f32 %v778, %v781
    %785 = vset.pattern.permute.xlu0 0
    %786 = vperm.xlu0 %785, %v783
    %v787 = vpop.permute.xlu0 %786
    %789 = vst [vmem:[#allocation12] sm:$0xff] %v787
    // Predicated region
    $region58: #{tpu_custom_call.1} parent=1 // pred_check
      _
    $region59: #{tpu_custom_call.1} parent=1 // pred_check_branch
      %791 = sbr.rel (0) target = $region61
    $region60: #{tpu_custom_call.1} parent=1 // pred_region
      %793 = vsyncadd [#allocation5], 0
      %s795 = sshll.u32 [#allocation12], 4
      %s796 = int_to_ptr.vmem [resolvable:$true] %s795
      %s797 = sshll.u32 %s9, 4
      %s798 = int_to_ptr.hbm [resolvable:$true] %s797
      %800 = dma.vmem_to_hbm [thread:$0]  %s796, 128, %s798, [#allocation5]
    $region61: #{tpu_custom_call.1} parent=1 // pred_fallthru
      _
    // Predicated region
    $region62: #{tpu_custom_call.1} parent=1 // pred_check
      _
    $region63: #{tpu_custom_call.1} parent=1 // pred_check_branch
      %802 = sbr.rel (0) target = $region65
    $region64: #{tpu_custom_call.1} parent=1 // pred_region
      %804 = dma.done [#allocation5], 128
    $region65: #{tpu_custom_call.1} parent=1 // pred_fallthru
      _
    %805 = vsyncpa [#allocation4], 1
    %806 = vsyncpa [#allocation7], 1
    %807 = vsyncpa [#allocation10], 1
    %808 = vsyncpa [#allocation5], 1

</llo_original>
